<compile_context>
chip_gen: v5e
topology: v5e:2x2
jax: 0.10.0
libtpu: 0.0.40
codegen_flags: <defaults>
</compile_context>

<pallas_src>
import functools
import math

import jax
import jax.numpy as jnp
from jax import lax
from jax.experimental import pallas as pl
from jax.experimental.pallas import tpu as pltpu

LN_EPS = 1e-5      # torch.nn.LayerNorm default eps
NEG_BIG = -1e30    # finite "-inf" (safe even if a row were ever fully masked)


# --------------------------------------------------------------------------
# Pallas kernel: one grid step == one batch element's (T, E) sequence.
# --------------------------------------------------------------------------
def _decoder_block_kernel(T, E, n_heads,
                          x_ref, wqkv_ref, bqkv_ref, ln_ref,
                          wo_ref, bo_ref, w1_ref, b1_ref, w2_ref, b2_ref,
                          o_ref):
    hd = E // n_heads
    x = x_ref[0]                                     # (T, E) f32

    def layer_norm(v, g, b):
        mu = jnp.mean(v, axis=-1, keepdims=True)
        var = jnp.mean(jnp.square(v - mu), axis=-1, keepdims=True)
        return (v - mu) * lax.rsqrt(var + LN_EPS) * g + b

    ln1_g = ln_ref[0:1, :]
    ln1_b = ln_ref[1:2, :]
    ln2_g = ln_ref[2:3, :]
    ln2_b = ln_ref[3:4, :]

    # ---- layer_norm_1 (f32) ----
    h = layer_norm(x, ln1_g, ln1_b)

    # ---- fused QKV projection: one bf16 matmul, f32 accumulation ----
    # 1/sqrt(hd) is already folded into the Q columns of wqkv / bqkv.
    qkv = jnp.dot(h.astype(jnp.bfloat16), wqkv_ref[...],
                  preferred_element_type=jnp.float32) + bqkv_ref[...]   # (T, 3E) f32
    qkv_lo = qkv.astype(jnp.bfloat16)

    # (T, T) causal mask built once from iotas.
    row = lax.broadcasted_iota(jnp.int32, (T, T), 0)
    col = lax.broadcasted_iota(jnp.int32, (T, T), 1)
    causal = row >= col

    # ---- causal self-attention ----
    # n_heads is tiny and static here; head outputs are assembled into the
    # per-batch (T, E) slab in registers (no scratch slab -> no masked partial
    # stores, no reload before the Wo matmul).
    # TODO(synk): at production sizes move heads onto a grid axis / fori_loop
    # and permute QKV columns at prep time so each head slab is 128-lane
    # aligned (hd=8 here cannot be tile-aligned).
    head_outs = []
    for hh in range(n_heads):                        # static, n_heads small
        c0 = hh * hd
        qh = qkv_lo[:, c0:c0 + hd]                   # (T, hd) bf16
        kh = qkv_lo[:, E + c0:E + c0 + hd]
        vh = qkv_lo[:, 2 * E + c0:2 * E + c0 + hd]
        # contract the head dim directly -- no kh.T / XLU transpose
        s = lax.dot_general(qh, kh, (((1,), (1,)), ((), ())),
                            preferred_element_type=jnp.float32)  # (T, T) f32
        s = jnp.where(causal, s, NEG_BIG)
        s = s - jnp.max(s, axis=-1, keepdims=True)
        p = jnp.exp(s)
        inv_l = pl.reciprocal(jnp.sum(p, axis=-1, keepdims=True), approx=True)
        o_h = jnp.dot(p.astype(jnp.bfloat16), vh,
                      preferred_element_type=jnp.float32) * inv_l  # (T, hd) f32
        head_outs.append(o_h.astype(jnp.bfloat16))

    attn_b = jnp.concatenate(head_outs, axis=-1)     # (T, E) bf16, in registers

    # ---- output projection ----
    attn = jnp.dot(attn_b, wo_ref[...],
                   preferred_element_type=jnp.float32) + bo_ref[...]   # (T, E) f32

    # ---- layer_norm_2 (f32) ----
    y = layer_norm(attn, ln2_g, ln2_b)

    # ---- MLP: Linear -> GELU -> Linear ----
    z = jnp.dot(y.astype(jnp.bfloat16), w1_ref[...],
                preferred_element_type=jnp.float32) + b1_ref[...]
    # TODO(synk): PyTorch nn.GELU() defaults to the exact erf form; tanh
    # approximation is used here since erf lowering is not guaranteed in Mosaic.
    z = jax.nn.gelu(z, approximate=True)
    z = jnp.dot(z.astype(jnp.bfloat16), w2_ref[...],
                preferred_element_type=jnp.float32) + b2_ref[...]

    o_ref[0] = z.astype(o_ref.dtype)


# --------------------------------------------------------------------------
# Wrapper: one-time parameter prep (re-layout / scale fold / bf16 cast) + call
# --------------------------------------------------------------------------
def transformer_decoder_block(x, params, n_heads):
    B, T, E = x.shape
    hd = E // n_heads
    Hm = params["W1"].shape[0]
    scale = 1.0 / math.sqrt(hd)

    f32, bf16 = jnp.float32, jnp.bfloat16

    # --- parameter prep (would be hoisted to model init in a real pipeline) ---
    # fused (E, 3E) QKV weight with the attention scale folded into Q cols/bias
    col_scale = jnp.concatenate(
        [jnp.full((E,), scale, f32), jnp.ones((2 * E,), f32)])
    wqkv_t = (params["Wqkv"].T.astype(f32) * col_scale[None, :]).astype(bf16)
    bqkv = (params["bqkv"].astype(f32) * col_scale).reshape(1, 3 * E)

    # pack the four LayerNorm vectors into one (4, E) array
    ln_pack = jnp.stack([params["ln1_g"], params["ln1_b"],
                         params["ln2_g"], params["ln2_b"]]).astype(f32)

    weights = [
        wqkv_t, bqkv, ln_pack,
        params["Wo"].T.astype(bf16), params["bo"].reshape(1, E).astype(f32),
        params["W1"].T.astype(bf16), params["b1"].reshape(1, Hm).astype(f32),
        params["W2"].T.astype(bf16), params["b2"].reshape(1, E).astype(f32),
    ]

    # weight-resident BlockSpecs: full-array block, constant index across grid
    def resident(shape):
        nd = len(shape)
        return pl.BlockSpec(shape, lambda b, _nd=nd: (0,) * _nd)

    in_specs = ([pl.BlockSpec((1, T, E), lambda b: (b, 0, 0))]
                + [resident(w.shape) for w in weights])
    out_specs = pl.BlockSpec((1, T, E), lambda b: (b, 0, 0))

    # advisory cost estimate for the XLA scheduler
    flops = 2 * B * (T * E * 3 * E            # QKV proj
                     + n_heads * 2 * T * T * hd  # scores + PV
                     + T * E * E               # Wo
                     + 2 * T * E * Hm)         # MLP
    transcendentals = B * (n_heads * T * T + T * Hm)   # softmax exp + gelu
    bytes_accessed = (x.size * 4 + B * T * E * 4
                      + sum(w.size * (2 if w.dtype == bf16 else 4)
                            for w in weights))

    kernel = functools.partial(_decoder_block_kernel, T, E, n_heads)

    out = pl.pallas_call(
        kernel,
        out_shape=jax.ShapeDtypeStruct((B, T, E), x.dtype),
        grid=(B,),
        in_specs=in_specs,
        out_specs=out_specs,
        compiler_params=pltpu.CompilerParams(
            dimension_semantics=("parallel",),
            vmem_limit_bytes=32 * 1024 * 1024),
        cost_estimate=pl.CostEstimate(flops=flops,
                                      transcendentals=transcendentals,
                                      bytes_accessed=bytes_accessed),
    )(x, *weights)

    return out


# --------------------------------------------------------------------------
# Pure-JAX f32 reference (mirrors the PyTorch forward) for a sanity check
# --------------------------------------------------------------------------
def reference_forward(x, p, n_heads):
    B, T, E = x.shape
    hd = E // n_heads

    def ln(v, g, b):
        mu = v.mean(-1, keepdims=True)
        var = ((v - mu) ** 2).mean(-1, keepdims=True)
        return (v - mu) / jnp.sqrt(var + LN_EPS) * g + b

    h = ln(x, p["ln1_g"], p["ln1_b"])
    qkv = h @ p["Wqkv"].T + p["bqkv"]
    q, k, v = jnp.split(qkv, 3, axis=-1)

    def split_heads(t):
        return t.reshape(B, T, n_heads, hd).transpose(0, 2, 1, 3)

    q, k, v = map(split_heads, (q, k, v))
    s = q @ k.transpose(0, 1, 3, 2) / math.sqrt(hd)
    mask = jnp.tril(jnp.ones((T, T), bool))
    s = jnp.where(mask, s, -jnp.inf)
    a = jax.nn.softmax(s, axis=-1)
    o = (a @ v).transpose(0, 2, 1, 3).reshape(B, T, E)
    o = o @ p["Wo"].T + p["bo"]
    y = ln(o, p["ln2_g"], p["ln2_b"])
    z = y @ p["W1"].T + p["b1"]
    z = jax.nn.gelu(z, approximate=True)
    z = z @ p["W2"].T + p["b2"]
    return z


if __name__ == "__main__":
    # small shapes consistent with the module
    B, T, E = 2, 8, 32
    N_HEADS = 4
    MLP_HIDDEN = 64

    key = jax.random.PRNGKey(0)
    ks = jax.random.split(key, 8)
    x = jax.random.normal(ks[0], (B, T, E), jnp.float32)

    params = {
        # LayerNorm defaults (gamma=1, beta=0)
        "ln1_g": jnp.ones((E,), jnp.float32), "ln1_b": jnp.zeros((E,), jnp.float32),
        "ln2_g": jnp.ones((E,), jnp.float32), "ln2_b": jnp.zeros((E,), jnp.float32),
        # fused qkv Linear(E, 3E): weight (3E, E), bias (3E,)
        "Wqkv": 0.02 * jax.random.normal(ks[1], (3 * E, E), jnp.float32),
        "bqkv": 0.02 * jax.random.normal(ks[2], (3 * E,), jnp.float32),
        # output proj Linear(E, E)
        "Wo": 0.02 * jax.random.normal(ks[3], (E, E), jnp.float32),
        "bo": 0.02 * jax.random.normal(ks[4], (E,), jnp.float32),
        # MLP Linear(E, H), Linear(H, E)
        "W1": 0.02 * jax.random.normal(ks[5], (MLP_HIDDEN, E), jnp.float32),
        "b1": 0.02 * jax.random.normal(ks[6], (MLP_HIDDEN,), jnp.float32),
        "W2": 0.02 * jax.random.normal(ks[7], (E, MLP_HIDDEN), jnp.float32),
        "b2": jnp.zeros((E,), jnp.float32),
    }

    out = transformer_decoder_block(x, params, N_HEADS)
    out = jax.block_until_ready(out)

    ref = reference_forward(x, params, N_HEADS)
    err = jnp.max(jnp.abs(out - ref))
    assert out.shape == (B, T, E)
    # tolerance covers the (intentional) bf16 matmul inputs + approx reciprocal
    assert jnp.allclose(out, ref, atol=5e-3, rtol=5e-2), f"max abs err {err}"

    print("KERNEL_OK")
</pallas_src>

<mosaic_0001>
module attributes {stable_mosaic.version = 11 : i64} {
  func.func @_decoder_block_kernel(%arg0: i32, %arg1: memref<1x8x32xf32, #tpu.memory_space<vmem>>, %arg2: memref<32x96xbf16, #tpu.memory_space<vmem>>, %arg3: memref<1x96xf32, #tpu.memory_space<vmem>>, %arg4: memref<4x32xf32, #tpu.memory_space<vmem>>, %arg5: memref<32x32xbf16, #tpu.memory_space<vmem>>, %arg6: memref<1x32xf32, #tpu.memory_space<vmem>>, %arg7: memref<32x64xbf16, #tpu.memory_space<vmem>>, %arg8: memref<1x64xf32, #tpu.memory_space<vmem>>, %arg9: memref<64x32xbf16, #tpu.memory_space<vmem>>, %arg10: memref<1x32xf32, #tpu.memory_space<vmem>>, %arg11: memref<1x8x32xf32, #tpu.memory_space<vmem>>) attributes {dimension_semantics = [#tpu.dimension_semantics<parallel>], iteration_bounds = array<i64: 2>, scalar_prefetch = 0 : i64, scratch_operands = 0 : i64, tpu.core_type = #tpu.core_type<tc>, window_params = [{transform_indices = @transform_0, window_bounds = array<i64: 1, 8, 32>}, {pipeline_mode = #tpu.pipeline_mode<synchronous>, transform_indices = @transform_1, window_bounds = array<i64: 32, 96>}, {pipeline_mode = #tpu.pipeline_mode<synchronous>, transform_indices = @transform_2, window_bounds = array<i64: 1, 96>}, {pipeline_mode = #tpu.pipeline_mode<synchronous>, transform_indices = @transform_3, window_bounds = array<i64: 4, 32>}, {pipeline_mode = #tpu.pipeline_mode<synchronous>, transform_indices = @transform_4, window_bounds = array<i64: 32, 32>}, {pipeline_mode = #tpu.pipeline_mode<synchronous>, transform_indices = @transform_5, window_bounds = array<i64: 1, 32>}, {pipeline_mode = #tpu.pipeline_mode<synchronous>, transform_indices = @transform_6, window_bounds = array<i64: 32, 64>}, {pipeline_mode = #tpu.pipeline_mode<synchronous>, transform_indices = @transform_7, window_bounds = array<i64: 1, 64>}, {pipeline_mode = #tpu.pipeline_mode<synchronous>, transform_indices = @transform_8, window_bounds = array<i64: 64, 32>}, {pipeline_mode = #tpu.pipeline_mode<synchronous>, transform_indices = @transform_9, window_bounds = array<i64: 1, 32>}, {transform_indices = @transform_10, window_bounds = array<i64: 1, 8, 32>}]} {
    %c0 = arith.constant 0 : index
    %c0_0 = arith.constant 0 : index
    %c0_1 = arith.constant 0 : index
    %0 = vector.load %arg1[%c0, %c0_0, %c0_1] : memref<1x8x32xf32, #tpu.memory_space<vmem>>, vector<1x8x32xf32>
    %1 = vector.shape_cast %0 : vector<1x8x32xf32> to vector<8x32xf32>
    %c0_2 = arith.constant 0 : index
    %c0_3 = arith.constant 0 : index
    %2 = vector.load %arg4[%c0_2, %c0_3] : memref<4x32xf32, #tpu.memory_space<vmem>>, vector<1x32xf32>
    %c1 = arith.constant 1 : index
    %c0_4 = arith.constant 0 : index
    %3 = vector.load %arg4[%c1, %c0_4] : memref<4x32xf32, #tpu.memory_space<vmem>>, vector<1x32xf32>
    %c2 = arith.constant 2 : index
    %c0_5 = arith.constant 0 : index
    %4 = vector.load %arg4[%c2, %c0_5] : memref<4x32xf32, #tpu.memory_space<vmem>>, vector<1x32xf32>
    %c3 = arith.constant 3 : index
    %c0_6 = arith.constant 0 : index
    %5 = vector.load %arg4[%c3, %c0_6] : memref<4x32xf32, #tpu.memory_space<vmem>>, vector<1x32xf32>
    %cst = arith.constant dense<0.000000e+00> : vector<8xf32>
    %6 = vector.multi_reduction <add>, %1, %cst [1] : vector<8x32xf32> to vector<8xf32>
    %7 = vector.shape_cast %6 : vector<8xf32> to vector<8x1xf32>
    %cst_7 = arith.constant 3.200000e+01 : f32
    %8 = vector.broadcast %cst_7 : f32 to vector<8x1xf32>
    %9 = arith.divf %7, %8 : vector<8x1xf32>
    %10 = vector.broadcast %9 : vector<8x1xf32> to vector<8x32xf32>
    %11 = arith.subf %1, %10 : vector<8x32xf32>
    %12 = arith.mulf %11, %11 : vector<8x32xf32>
    %cst_8 = arith.constant dense<0.000000e+00> : vector<8xf32>
    %13 = vector.multi_reduction <add>, %12, %cst_8 [1] : vector<8x32xf32> to vector<8xf32>
    %14 = vector.shape_cast %13 : vector<8xf32> to vector<8x1xf32>
    %cst_9 = arith.constant 3.200000e+01 : f32
    %15 = vector.broadcast %cst_9 : f32 to vector<8x1xf32>
    %16 = arith.divf %14, %15 : vector<8x1xf32>
    %17 = vector.broadcast %9 : vector<8x1xf32> to vector<8x32xf32>
    %18 = arith.subf %1, %17 : vector<8x32xf32>
    %cst_10 = arith.constant 9.99999974E-6 : f32
    %19 = vector.broadcast %cst_10 : f32 to vector<8x1xf32>
    %20 = arith.addf %16, %19 : vector<8x1xf32>
    %21 = math.rsqrt %20 : vector<8x1xf32>
    %22 = vector.broadcast %21 : vector<8x1xf32> to vector<8x32xf32>
    %23 = arith.mulf %18, %22 : vector<8x32xf32>
    %24 = vector.broadcast %2 : vector<1x32xf32> to vector<8x32xf32>
    %25 = arith.mulf %23, %24 : vector<8x32xf32>
    %26 = vector.broadcast %3 : vector<1x32xf32> to vector<8x32xf32>
    %27 = arith.addf %25, %26 : vector<8x32xf32>
    %28 = arith.truncf %27 : vector<8x32xf32> to vector<8x32xbf16>
    %c0_11 = arith.constant 0 : index
    %c0_12 = arith.constant 0 : index
    %29 = vector.load %arg2[%c0_11, %c0_12] : memref<32x96xbf16, #tpu.memory_space<vmem>>, vector<32x96xbf16>
    %cst_13 = arith.constant dense<0.000000e+00> : vector<8x96xf32>
    %30 = tpu.matmul %28, %29, %cst_13 {dimension_numbers = #tpu.dot_dimension_numbers<[1], [0], [0], [1], [0, 0, 1, 1], [], []>} : vector<8x32xbf16>, vector<32x96xbf16>, vector<8x96xf32> -> vector<8x96xf32>
    %c0_14 = arith.constant 0 : index
    %c0_15 = arith.constant 0 : index
    %31 = vector.load %arg3[%c0_14, %c0_15] : memref<1x96xf32, #tpu.memory_space<vmem>>, vector<1x96xf32>
    %32 = vector.broadcast %31 : vector<1x96xf32> to vector<8x96xf32>
    %33 = arith.addf %30, %32 : vector<8x96xf32>
    %34 = arith.truncf %33 : vector<8x96xf32> to vector<8x96xbf16>
    %35 = tpu.iota {dimensions = array<i32: 0>} : vector<8x8xi32>
    %36 = tpu.iota {dimensions = array<i32: 1>} : vector<8x8xi32>
    %37 = arith.cmpi sge, %35, %36 : vector<8x8xi32>
    %38 = vector.extract_strided_slice %34 {offsets = [0, 0], sizes = [8, 8], strides = [1, 1]} : vector<8x96xbf16> to vector<8x8xbf16>
    %39 = vector.extract_strided_slice %34 {offsets = [0, 32], sizes = [8, 8], strides = [1, 1]} : vector<8x96xbf16> to vector<8x8xbf16>
    %40 = vector.extract_strided_slice %34 {offsets = [0, 64], sizes = [8, 8], strides = [1, 1]} : vector<8x96xbf16> to vector<8x8xbf16>
    %cst_16 = arith.constant dense<0.000000e+00> : vector<8x8xf32>
    %41 = tpu.matmul %38, %39, %cst_16 {dimension_numbers = #tpu.dot_dimension_numbers<[1], [1], [0], [0], [0, 0, 1, 0], [], []>} : vector<8x8xbf16>, vector<8x8xbf16>, vector<8x8xf32> -> vector<8x8xf32>
    %cst_17 = arith.constant -1.000000e+30 : f32
    %42 = vector.broadcast %cst_17 : f32 to vector<8x8xf32>
    %43 = arith.select %37, %41, %42 : vector<8x8xi1>, vector<8x8xf32>
    %cst_18 = arith.constant dense<0xFF800000> : vector<8xf32>
    %44 = vector.multi_reduction <maximumf>, %43, %cst_18 [1] : vector<8x8xf32> to vector<8xf32>
    %45 = vector.shape_cast %44 : vector<8xf32> to vector<8x1xf32>
    %46 = vector.broadcast %45 : vector<8x1xf32> to vector<8x8xf32>
    %47 = arith.subf %43, %46 : vector<8x8xf32>
    %48 = math.exp %47 : vector<8x8xf32>
    %cst_19 = arith.constant dense<0.000000e+00> : vector<8xf32>
    %49 = vector.multi_reduction <add>, %48, %cst_19 [1] : vector<8x8xf32> to vector<8xf32>
    %50 = vector.shape_cast %49 : vector<8xf32> to vector<8x1xf32>
    %51 = tpu.reciprocal %50 {approx = true} : vector<8x1xf32> -> vector<8x1xf32>
    %52 = arith.truncf %48 : vector<8x8xf32> to vector<8x8xbf16>
    %cst_20 = arith.constant dense<0.000000e+00> : vector<8x8xf32>
    %53 = tpu.matmul %52, %40, %cst_20 {dimension_numbers = #tpu.dot_dimension_numbers<[1], [0], [0], [1], [0, 0, 1, 1], [], []>} : vector<8x8xbf16>, vector<8x8xbf16>, vector<8x8xf32> -> vector<8x8xf32>
    %54 = vector.broadcast %51 : vector<8x1xf32> to vector<8x8xf32>
    %55 = arith.mulf %53, %54 : vector<8x8xf32>
    %56 = arith.truncf %55 : vector<8x8xf32> to vector<8x8xbf16>
    %57 = vector.extract_strided_slice %34 {offsets = [0, 8], sizes = [8, 8], strides = [1, 1]} : vector<8x96xbf16> to vector<8x8xbf16>
    %58 = vector.extract_strided_slice %34 {offsets = [0, 40], sizes = [8, 8], strides = [1, 1]} : vector<8x96xbf16> to vector<8x8xbf16>
    %59 = vector.extract_strided_slice %34 {offsets = [0, 72], sizes = [8, 8], strides = [1, 1]} : vector<8x96xbf16> to vector<8x8xbf16>
    %cst_21 = arith.constant dense<0.000000e+00> : vector<8x8xf32>
    %60 = tpu.matmul %57, %58, %cst_21 {dimension_numbers = #tpu.dot_dimension_numbers<[1], [1], [0], [0], [0, 0, 1, 0], [], []>} : vector<8x8xbf16>, vector<8x8xbf16>, vector<8x8xf32> -> vector<8x8xf32>
    %cst_22 = arith.constant -1.000000e+30 : f32
    %61 = vector.broadcast %cst_22 : f32 to vector<8x8xf32>
    %62 = arith.select %37, %60, %61 : vector<8x8xi1>, vector<8x8xf32>
    %cst_23 = arith.constant dense<0xFF800000> : vector<8xf32>
    %63 = vector.multi_reduction <maximumf>, %62, %cst_23 [1] : vector<8x8xf32> to vector<8xf32>
    %64 = vector.shape_cast %63 : vector<8xf32> to vector<8x1xf32>
    %65 = vector.broadcast %64 : vector<8x1xf32> to vector<8x8xf32>
    %66 = arith.subf %62, %65 : vector<8x8xf32>
    %67 = math.exp %66 : vector<8x8xf32>
    %cst_24 = arith.constant dense<0.000000e+00> : vector<8xf32>
    %68 = vector.multi_reduction <add>, %67, %cst_24 [1] : vector<8x8xf32> to vector<8xf32>
    %69 = vector.shape_cast %68 : vector<8xf32> to vector<8x1xf32>
    %70 = tpu.reciprocal %69 {approx = true} : vector<8x1xf32> -> vector<8x1xf32>
    %71 = arith.truncf %67 : vector<8x8xf32> to vector<8x8xbf16>
    %cst_25 = arith.constant dense<0.000000e+00> : vector<8x8xf32>
    %72 = tpu.matmul %71, %59, %cst_25 {dimension_numbers = #tpu.dot_dimension_numbers<[1], [0], [0], [1], [0, 0, 1, 1], [], []>} : vector<8x8xbf16>, vector<8x8xbf16>, vector<8x8xf32> -> vector<8x8xf32>
    %73 = vector.broadcast %70 : vector<8x1xf32> to vector<8x8xf32>
    %74 = arith.mulf %72, %73 : vector<8x8xf32>
    %75 = arith.truncf %74 : vector<8x8xf32> to vector<8x8xbf16>
    %76 = vector.extract_strided_slice %34 {offsets = [0, 16], sizes = [8, 8], strides = [1, 1]} : vector<8x96xbf16> to vector<8x8xbf16>
    %77 = vector.extract_strided_slice %34 {offsets = [0, 48], sizes = [8, 8], strides = [1, 1]} : vector<8x96xbf16> to vector<8x8xbf16>
    %78 = vector.extract_strided_slice %34 {offsets = [0, 80], sizes = [8, 8], strides = [1, 1]} : vector<8x96xbf16> to vector<8x8xbf16>
    %cst_26 = arith.constant dense<0.000000e+00> : vector<8x8xf32>
    %79 = tpu.matmul %76, %77, %cst_26 {dimension_numbers = #tpu.dot_dimension_numbers<[1], [1], [0], [0], [0, 0, 1, 0], [], []>} : vector<8x8xbf16>, vector<8x8xbf16>, vector<8x8xf32> -> vector<8x8xf32>
    %cst_27 = arith.constant -1.000000e+30 : f32
    %80 = vector.broadcast %cst_27 : f32 to vector<8x8xf32>
    %81 = arith.select %37, %79, %80 : vector<8x8xi1>, vector<8x8xf32>
    %cst_28 = arith.constant dense<0xFF800000> : vector<8xf32>
    %82 = vector.multi_reduction <maximumf>, %81, %cst_28 [1] : vector<8x8xf32> to vector<8xf32>
    %83 = vector.shape_cast %82 : vector<8xf32> to vector<8x1xf32>
    %84 = vector.broadcast %83 : vector<8x1xf32> to vector<8x8xf32>
    %85 = arith.subf %81, %84 : vector<8x8xf32>
    %86 = math.exp %85 : vector<8x8xf32>
    %cst_29 = arith.constant dense<0.000000e+00> : vector<8xf32>
    %87 = vector.multi_reduction <add>, %86, %cst_29 [1] : vector<8x8xf32> to vector<8xf32>
    %88 = vector.shape_cast %87 : vector<8xf32> to vector<8x1xf32>
    %89 = tpu.reciprocal %88 {approx = true} : vector<8x1xf32> -> vector<8x1xf32>
    %90 = arith.truncf %86 : vector<8x8xf32> to vector<8x8xbf16>
    %cst_30 = arith.constant dense<0.000000e+00> : vector<8x8xf32>
    %91 = tpu.matmul %90, %78, %cst_30 {dimension_numbers = #tpu.dot_dimension_numbers<[1], [0], [0], [1], [0, 0, 1, 1], [], []>} : vector<8x8xbf16>, vector<8x8xbf16>, vector<8x8xf32> -> vector<8x8xf32>
    %92 = vector.broadcast %89 : vector<8x1xf32> to vector<8x8xf32>
    %93 = arith.mulf %91, %92 : vector<8x8xf32>
    %94 = arith.truncf %93 : vector<8x8xf32> to vector<8x8xbf16>
    %95 = vector.extract_strided_slice %34 {offsets = [0, 24], sizes = [8, 8], strides = [1, 1]} : vector<8x96xbf16> to vector<8x8xbf16>
    %96 = vector.extract_strided_slice %34 {offsets = [0, 56], sizes = [8, 8], strides = [1, 1]} : vector<8x96xbf16> to vector<8x8xbf16>
    %97 = vector.extract_strided_slice %34 {offsets = [0, 88], sizes = [8, 8], strides = [1, 1]} : vector<8x96xbf16> to vector<8x8xbf16>
    %cst_31 = arith.constant dense<0.000000e+00> : vector<8x8xf32>
    %98 = tpu.matmul %95, %96, %cst_31 {dimension_numbers = #tpu.dot_dimension_numbers<[1], [1], [0], [0], [0, 0, 1, 0], [], []>} : vector<8x8xbf16>, vector<8x8xbf16>, vector<8x8xf32> -> vector<8x8xf32>
    %cst_32 = arith.constant -1.000000e+30 : f32
    %99 = vector.broadcast %cst_32 : f32 to vector<8x8xf32>
    %100 = arith.select %37, %98, %99 : vector<8x8xi1>, vector<8x8xf32>
    %cst_33 = arith.constant dense<0xFF800000> : vector<8xf32>
    %101 = vector.multi_reduction <maximumf>, %100, %cst_33 [1] : vector<8x8xf32> to vector<8xf32>
    %102 = vector.shape_cast %101 : vector<8xf32> to vector<8x1xf32>
    %103 = vector.broadcast %102 : vector<8x1xf32> to vector<8x8xf32>
    %104 = arith.subf %100, %103 : vector<8x8xf32>
    %105 = math.exp %104 : vector<8x8xf32>
    %cst_34 = arith.constant dense<0.000000e+00> : vector<8xf32>
    %106 = vector.multi_reduction <add>, %105, %cst_34 [1] : vector<8x8xf32> to vector<8xf32>
    %107 = vector.shape_cast %106 : vector<8xf32> to vector<8x1xf32>
    %108 = tpu.reciprocal %107 {approx = true} : vector<8x1xf32> -> vector<8x1xf32>
    %109 = arith.truncf %105 : vector<8x8xf32> to vector<8x8xbf16>
    %cst_35 = arith.constant dense<0.000000e+00> : vector<8x8xf32>
    %110 = tpu.matmul %109, %97, %cst_35 {dimension_numbers = #tpu.dot_dimension_numbers<[1], [0], [0], [1], [0, 0, 1, 1], [], []>} : vector<8x8xbf16>, vector<8x8xbf16>, vector<8x8xf32> -> vector<8x8xf32>
    %111 = vector.broadcast %108 : vector<8x1xf32> to vector<8x8xf32>
    %112 = arith.mulf %110, %111 : vector<8x8xf32>
    %113 = arith.truncf %112 : vector<8x8xf32> to vector<8x8xbf16>
    %114 = tpu.concatenate %56, %75, %94, %113 in 1 : vector<8x8xbf16>, vector<8x8xbf16>, vector<8x8xbf16>, vector<8x8xbf16> -> vector<8x32xbf16>
    %c0_36 = arith.constant 0 : index
    %c0_37 = arith.constant 0 : index
    %115 = vector.load %arg5[%c0_36, %c0_37] : memref<32x32xbf16, #tpu.memory_space<vmem>>, vector<32x32xbf16>
    %cst_38 = arith.constant dense<0.000000e+00> : vector<8x32xf32>
    %116 = tpu.matmul %114, %115, %cst_38 {dimension_numbers = #tpu.dot_dimension_numbers<[1], [0], [0], [1], [0, 0, 1, 1], [], []>} : vector<8x32xbf16>, vector<32x32xbf16>, vector<8x32xf32> -> vector<8x32xf32>
    %c0_39 = arith.constant 0 : index
    %c0_40 = arith.constant 0 : index
    %117 = vector.load %arg6[%c0_39, %c0_40] : memref<1x32xf32, #tpu.memory_space<vmem>>, vector<1x32xf32>
    %118 = vector.broadcast %117 : vector<1x32xf32> to vector<8x32xf32>
    %119 = arith.addf %116, %118 : vector<8x32xf32>
    %cst_41 = arith.constant dense<0.000000e+00> : vector<8xf32>
    %120 = vector.multi_reduction <add>, %119, %cst_41 [1] : vector<8x32xf32> to vector<8xf32>
    %121 = vector.shape_cast %120 : vector<8xf32> to vector<8x1xf32>
    %cst_42 = arith.constant 3.200000e+01 : f32
    %122 = vector.broadcast %cst_42 : f32 to vector<8x1xf32>
    %123 = arith.divf %121, %122 : vector<8x1xf32>
    %124 = vector.broadcast %123 : vector<8x1xf32> to vector<8x32xf32>
    %125 = arith.subf %119, %124 : vector<8x32xf32>
    %126 = arith.mulf %125, %125 : vector<8x32xf32>
    %cst_43 = arith.constant dense<0.000000e+00> : vector<8xf32>
    %127 = vector.multi_reduction <add>, %126, %cst_43 [1] : vector<8x32xf32> to vector<8xf32>
    %128 = vector.shape_cast %127 : vector<8xf32> to vector<8x1xf32>
    %cst_44 = arith.constant 3.200000e+01 : f32
    %129 = vector.broadcast %cst_44 : f32 to vector<8x1xf32>
    %130 = arith.divf %128, %129 : vector<8x1xf32>
    %131 = vector.broadcast %123 : vector<8x1xf32> to vector<8x32xf32>
    %132 = arith.subf %119, %131 : vector<8x32xf32>
    %cst_45 = arith.constant 9.99999974E-6 : f32
    %133 = vector.broadcast %cst_45 : f32 to vector<8x1xf32>
    %134 = arith.addf %130, %133 : vector<8x1xf32>
    %135 = math.rsqrt %134 : vector<8x1xf32>
    %136 = vector.broadcast %135 : vector<8x1xf32> to vector<8x32xf32>
    %137 = arith.mulf %132, %136 : vector<8x32xf32>
    %138 = vector.broadcast %4 : vector<1x32xf32> to vector<8x32xf32>
    %139 = arith.mulf %137, %138 : vector<8x32xf32>
    %140 = vector.broadcast %5 : vector<1x32xf32> to vector<8x32xf32>
    %141 = arith.addf %139, %140 : vector<8x32xf32>
    %142 = arith.truncf %141 : vector<8x32xf32> to vector<8x32xbf16>
    %c0_46 = arith.constant 0 : index
    %c0_47 = arith.constant 0 : index
    %143 = vector.load %arg7[%c0_46, %c0_47] : memref<32x64xbf16, #tpu.memory_space<vmem>>, vector<32x64xbf16>
    %cst_48 = arith.constant dense<0.000000e+00> : vector<8x64xf32>
    %144 = tpu.matmul %142, %143, %cst_48 {dimension_numbers = #tpu.dot_dimension_numbers<[1], [0], [0], [1], [0, 0, 1, 1], [], []>} : vector<8x32xbf16>, vector<32x64xbf16>, vector<8x64xf32> -> vector<8x64xf32>
    %c0_49 = arith.constant 0 : index
    %c0_50 = arith.constant 0 : index
    %145 = vector.load %arg8[%c0_49, %c0_50] : memref<1x64xf32, #tpu.memory_space<vmem>>, vector<1x64xf32>
    %146 = vector.broadcast %145 : vector<1x64xf32> to vector<8x64xf32>
    %147 = arith.addf %144, %146 : vector<8x64xf32>
    %148 = arith.mulf %147, %147 : vector<8x64xf32>
    %149 = arith.mulf %147, %148 : vector<8x64xf32>
    %cst_51 = arith.constant 4.471500e-02 : f32
    %150 = vector.broadcast %cst_51 : f32 to vector<8x64xf32>
    %151 = arith.mulf %150, %149 : vector<8x64xf32>
    %152 = arith.addf %147, %151 : vector<8x64xf32>
    %cst_52 = arith.constant 0.797884583 : f32
    %153 = vector.broadcast %cst_52 : f32 to vector<8x64xf32>
    %154 = arith.mulf %153, %152 : vector<8x64xf32>
    %155 = math.tanh %154 : vector<8x64xf32>
    %cst_53 = arith.constant 1.000000e+00 : f32
    %156 = vector.broadcast %cst_53 : f32 to vector<8x64xf32>
    %157 = arith.addf %156, %155 : vector<8x64xf32>
    %cst_54 = arith.constant 5.000000e-01 : f32
    %158 = vector.broadcast %cst_54 : f32 to vector<8x64xf32>
    %159 = arith.mulf %158, %157 : vector<8x64xf32>
    %160 = arith.mulf %147, %159 : vector<8x64xf32>
    %161 = arith.truncf %160 : vector<8x64xf32> to vector<8x64xbf16>
    %c0_55 = arith.constant 0 : index
    %c0_56 = arith.constant 0 : index
    %162 = vector.load %arg9[%c0_55, %c0_56] : memref<64x32xbf16, #tpu.memory_space<vmem>>, vector<64x32xbf16>
    %cst_57 = arith.constant dense<0.000000e+00> : vector<8x32xf32>
    %163 = tpu.matmul %161, %162, %cst_57 {dimension_numbers = #tpu.dot_dimension_numbers<[1], [0], [0], [1], [0, 0, 1, 1], [], []>} : vector<8x64xbf16>, vector<64x32xbf16>, vector<8x32xf32> -> vector<8x32xf32>
    %c0_58 = arith.constant 0 : index
    %c0_59 = arith.constant 0 : index
    %164 = vector.load %arg10[%c0_58, %c0_59] : memref<1x32xf32, #tpu.memory_space<vmem>>, vector<1x32xf32>
    %165 = vector.broadcast %164 : vector<1x32xf32> to vector<8x32xf32>
    %166 = arith.addf %163, %165 : vector<8x32xf32>
    %c0_60 = arith.constant 0 : index
    %c0_61 = arith.constant 0 : index
    %c0_62 = arith.constant 0 : index
    %167 = vector.load %arg11[%c0_60, %c0_61, %c0_62] : memref<1x8x32xf32, #tpu.memory_space<vmem>>, vector<1x8x32xf32>
    %168 = vector.shape_cast %167 : vector<1x8x32xf32> to vector<8x32xf32>
    %169 = vector.shape_cast %166 : vector<8x32xf32> to vector<1x8x32xf32>
    tpu.vector_store %arg11[%c0_60, %c0_61, %c0_62], %169 {strides = array<i32>} : memref<1x8x32xf32, #tpu.memory_space<vmem>>, vector<1x8x32xf32>,
    return
  }
  func.func @transform_0(%arg0: i32) -> (i32, i32, i32) {
    %c0_i32 = arith.constant 0 : i32
    %c0_i32_0 = arith.constant 0 : i32
    %c0_i32_1 = arith.constant 0 : i32
    return %arg0, %c0_i32, %c0_i32_0 : i32, i32, i32
  }
  func.func @transform_1(%arg0: i32) -> (i32, i32) {
    %c0_i32 = arith.constant 0 : i32
    %c0_i32_0 = arith.constant 0 : i32
    %c0_i32_1 = arith.constant 0 : i32
    return %c0_i32, %c0_i32_0 : i32, i32
  }
  func.func @transform_2(%arg0: i32) -> (i32, i32) {
    %c0_i32 = arith.constant 0 : i32
    %c0_i32_0 = arith.constant 0 : i32
    %c0_i32_1 = arith.constant 0 : i32
    return %c0_i32, %c0_i32_0 : i32, i32
  }
  func.func @transform_3(%arg0: i32) -> (i32, i32) {
    %c0_i32 = arith.constant 0 : i32
    %c0_i32_0 = arith.constant 0 : i32
    %c0_i32_1 = arith.constant 0 : i32
    return %c0_i32, %c0_i32_0 : i32, i32
  }
  func.func @transform_4(%arg0: i32) -> (i32, i32) {
    %c0_i32 = arith.constant 0 : i32
    %c0_i32_0 = arith.constant 0 : i32
    %c0_i32_1 = arith.constant 0 : i32
    return %c0_i32, %c0_i32_0 : i32, i32
  }
  func.func @transform_5(%arg0: i32) -> (i32, i32) {
    %c0_i32 = arith.constant 0 : i32
    %c0_i32_0 = arith.constant 0 : i32
    %c0_i32_1 = arith.constant 0 : i32
    return %c0_i32, %c0_i32_0 : i32, i32
  }
  func.func @transform_6(%arg0: i32) -> (i32, i32) {
    %c0_i32 = arith.constant 0 : i32
    %c0_i32_0 = arith.constant 0 : i32
    %c0_i32_1 = arith.constant 0 : i32
    return %c0_i32, %c0_i32_0 : i32, i32
  }
  func.func @transform_7(%arg0: i32) -> (i32, i32) {
    %c0_i32 = arith.constant 0 : i32
    %c0_i32_0 = arith.constant 0 : i32
    %c0_i32_1 = arith.constant 0 : i32
    return %c0_i32, %c0_i32_0 : i32, i32
  }
  func.func @transform_8(%arg0: i32) -> (i32, i32) {
    %c0_i32 = arith.constant 0 : i32
    %c0_i32_0 = arith.constant 0 : i32
    %c0_i32_1 = arith.constant 0 : i32
    return %c0_i32, %c0_i32_0 : i32, i32
  }
  func.func @transform_9(%arg0: i32) -> (i32, i32) {
    %c0_i32 = arith.constant 0 : i32
    %c0_i32_0 = arith.constant 0 : i32
    %c0_i32_1 = arith.constant 0 : i32
    return %c0_i32, %c0_i32_0 : i32, i32
  }
  func.func @transform_10(%arg0: i32) -> (i32, i32, i32) {
    %c0_i32 = arith.constant 0 : i32
    %c0_i32_0 = arith.constant 0 : i32
    %c0_i32_1 = arith.constant 0 : i32
    return %arg0, %c0_i32, %c0_i32_0 : i32, i32, i32
  }
}

</mosaic_0001>

<llo_original>
// kernel: tpu_custom_call.1
$region0: #{tpu_custom_call.1}
  #allocation0 [shape = 'u32[]', space=smem, size = 0x4, offset = 0x4, fixed_abs, tag = 'smem constant byte address 0x4 - core index']
  #allocation1 [shape = 'u32[72,128]{1,0:T(1,128)}', space=vmem, size = 0x9000, scoped, tag = 'internal scratch']
  %s0 = inlined_call_operand.vmem [shape: f32[2,8,32], index: 0, kind: input, shape index: {}]
  %s1 = inlined_call_operand.vmem [shape: bf16[32,96], index: 1, kind: input, shape index: {}]
  %s2 = inlined_call_operand.vmem [shape: f32[1,96], index: 2, kind: input, shape index: {}]
  %s3 = inlined_call_operand.hbm [shape: f32[4,32], index: 3, kind: input, shape index: {}]
  %s4 = inlined_call_operand.vmem [shape: bf16[32,32], index: 4, kind: input, shape index: {}]
  %s5 = inlined_call_operand.vmem [shape: f32[1,32], index: 5, kind: input, shape index: {}]
  %s6 = inlined_call_operand.hbm [shape: bf16[32,64], index: 6, kind: input, shape index: {}]
  %s7 = inlined_call_operand.vmem [shape: f32[1,64], index: 7, kind: input, shape index: {}]
  %s8 = inlined_call_operand.vmem [shape: bf16[64,32], index: 8, kind: input, shape index: {}]
  %s9 = inlined_call_operand.vmem [shape: f32[1,32], index: 9, kind: input, shape index: {}]
  %s10 = inlined_call_operand.hbm [shape: f32[2,8,32], index: 10, kind: output, shape index: {}]
  %s11 = sld [smem:[#allocation0]]
  $region81: #{tpu_custom_call.1} parent=0
    _
  %s13 = ssub.s32 1, %s11
  %s14 = scalar_select 0, %s13, %s11
  $region1: #{tpu_custom_call.1} parent=0
    #allocation2 [shape = 'u8[2048]{0}', space=vmem, size = 0x800, scoped, tag = 'input window, operand 3, single buffered']
    #allocation3 [shape = 's32[2]{0}', space=sflag, size = 0x8, scoped, tag = 'scoped memory for tpu_custom_call.1']
    #allocation4 [shape = 's32[2]{0}', space=sflag, size = 0x8, scoped, tag = 'scoped memory for tpu_custom_call.1']
    #allocation5 [shape = 'u8[8192]{0}', space=vmem, size = 0x2000, scoped, tag = 'input window, operand 6, single buffered']
    #allocation6 [shape = 's32[1]{0}', space=sflag, size = 0x4, scoped, tag = 'scoped memory for tpu_custom_call.1']
    #allocation7 [shape = 'u8[8192]{0}', space=vmem, size = 0x2000, scoped, tag = 'output window, operand 0']
    %15 = vsyncpa [#allocation3], 0
    %16 = vsyncpa [#allocation6], 0
    %17 = vsyncpa [#allocation4], 0
    %s18 = scalar_lea.sflag [#allocation4], 1
    %19 = vsyncpa %s18, 0
    loop: start=0, step=1, limit=4
    $region2: #{tpu_custom_call.1} parent=1 // loop_pre_header
      _
    $region3: #{tpu_custom_call.1} parent=1 // loop_header
      %s21 = sphi 0, %s25
      %p22 = scmp.ge.s32.totalorder %s21, 4
      %s31 = sphi 0, %s33
      %s34 = sphi 0, %s31
      %s35 = sphi 0, %s34
      %s51 = sphi 0, %s35
      %s55 = sphi 0, %s55
      %s57 = sphi 0, %s55
      %s58 = sphi 0, %s57
      %s72 = sphi 0, %s58
      %s76 = sphi 0, %s76
      %s78 = sphi 0, %s76
      %s79 = sphi 0, %s78
      %s93 = sphi 0, %s79
      %s97 = sphi 0, %s97
      %s99 = sphi 0, %s97
      %s100 = sphi 0, %s99
      %s114 = sphi 0, %s100
      %s118 = sphi 0, %s118
      %s120 = sphi 0, %s118
      %s121 = sphi 0, %s120
      %s135 = sphi 0, %s121
      %s139 = sphi 0, %s139
      %s141 = sphi 0, %s139
      %s142 = sphi 0, %s141
      %s156 = sphi 0, %s142
      %s160 = sphi 0, %s160
      %s162 = sphi 0, %s160
      %s163 = sphi 0, %s162
      %s177 = sphi 0, %s163
      %s181 = sphi 0, %s181
      %s183 = sphi 0, %s181
      %s184 = sphi 0, %s183
      %s198 = sphi 0, %s184
      %s202 = sphi 0, %s202
      %s204 = sphi 0, %s202
      %s205 = sphi 0, %s204
      %s219 = sphi 0, %s205
      %s223 = sphi 0, %s223
      %s225 = sphi 0, %s223
      %s226 = sphi 0, %s225
      %s240 = sphi 0, %s226
      %s246 = sphi 0, %s248
      %s249 = sphi 0, %s246
      %s250 = sphi 0, %s249
      %s266 = sphi 0, %s250
    $region4: #{tpu_custom_call.1} parent=1 // loop_header_branch
      %24 = sbr.rel (%p22) target = $region8
    $region5: #{tpu_custom_call.1} parent=1 // loop_body
      %s26 = ssub.s32 %s21, 1
      %s27 = ssub.s32 %s21, 2
      %s28 = sadd.s32 %s21, 1
      %s29 = ssub.s32 %s21, %s28
      %p30 = scmp.eq.s32.totalorder %s29, 0
      %s32 = sadd.s32 %s31, 1
      %s33 = scalar_select %p30, %s31, %s32
      %p36 = pneg %p30
      %p37 = scmp.eq.s32.totalorder %s21, 1
      %p38 = por %p36, %p37
      %p39 = scmp.ne.s32.totalorder %s31, %s34
      %p40 = scmp.eq.s32.totalorder %s21, 0
      %p41 = por %p39, %p40
      %p42 = scmp.ne.s32.totalorder %s31, %s34
      %p43 = scmp.eq.s32.totalorder %s26, 1
      %p44 = por %p42, %p43
      %p45 = scmp.ne.s32.totalorder %s34, %s35
      %p46 = scmp.eq.s32.totalorder %s26, 0
      %p47 = por %p45, %p46
      %p48 = scmp.ne.s32.totalorder %s34, %s35
      %p49 = scmp.eq.s32.totalorder %s27, 1
      %p50 = por %p48, %p49
      %p52 = scmp.ne.s32.totalorder %s35, %s51
      %p53 = scmp.eq.s32.totalorder %s27, 0
      %p54 = por %p52, %p53
      %s56 = sadd.s32 %s55, 1
      %p59 = scmp.eq.s32.totalorder %s21, 1
      %p60 = scmp.ne.s32.totalorder %s55, %s57
      %p61 = scmp.eq.s32.totalorder %s21, 0
      %p62 = por %p60, %p61
      %p63 = scmp.ne.s32.totalorder %s55, %s57
      %p64 = scmp.eq.s32.totalorder %s26, 1
      %p65 = por %p63, %p64
      %p66 = scmp.ne.s32.totalorder %s57, %s58
      %p67 = scmp.eq.s32.totalorder %s26, 0
      %p68 = por %p66, %p67
      %p69 = scmp.ne.s32.totalorder %s57, %s58
      %p70 = scmp.eq.s32.totalorder %s27, 1
      %p71 = por %p69, %p70
      %p73 = scmp.ne.s32.totalorder %s58, %s72
      %p74 = scmp.eq.s32.totalorder %s27, 0
      %p75 = por %p73, %p74
      %s77 = sadd.s32 %s76, 1
      %p80 = scmp.eq.s32.totalorder %s21, 1
      %p81 = scmp.ne.s32.totalorder %s76, %s78
      %p82 = scmp.eq.s32.totalorder %s21, 0
      %p83 = por %p81, %p82
      %p84 = scmp.ne.s32.totalorder %s76, %s78
      %p85 = scmp.eq.s32.totalorder %s26, 1
      %p86 = por %p84, %p85
      %p87 = scmp.ne.s32.totalorder %s78, %s79
      %p88 = scmp.eq.s32.totalorder %s26, 0
      %p89 = por %p87, %p88
      %p90 = scmp.ne.s32.totalorder %s78, %s79
      %p91 = scmp.eq.s32.totalorder %s27, 1
      %p92 = por %p90, %p91
      %p94 = scmp.ne.s32.totalorder %s79, %s93
      %p95 = scmp.eq.s32.totalorder %s27, 0
      %p96 = por %p94, %p95
      %s98 = sadd.s32 %s97, 1
      %p101 = scmp.eq.s32.totalorder %s21, 1
      %p102 = scmp.ne.s32.totalorder %s97, %s99
      %p103 = scmp.eq.s32.totalorder %s21, 0
      %p104 = por %p102, %p103
      %p105 = scmp.ne.s32.totalorder %s97, %s99
      %p106 = scmp.eq.s32.totalorder %s26, 1
      %p107 = por %p105, %p106
      %p108 = scmp.ne.s32.totalorder %s99, %s100
      %p109 = scmp.eq.s32.totalorder %s26, 0
      %p110 = por %p108, %p109
      %p111 = scmp.ne.s32.totalorder %s99, %s100
      %p112 = scmp.eq.s32.totalorder %s27, 1
      %p113 = por %p111, %p112
      %p115 = scmp.ne.s32.totalorder %s100, %s114
      %p116 = scmp.eq.s32.totalorder %s27, 0
      %p117 = por %p115, %p116
      %s119 = sadd.s32 %s118, 1
      %p122 = scmp.eq.s32.totalorder %s21, 1
      %p123 = scmp.ne.s32.totalorder %s118, %s120
      %p124 = scmp.eq.s32.totalorder %s21, 0
      %p125 = por %p123, %p124
      %p126 = scmp.ne.s32.totalorder %s118, %s120
      %p127 = scmp.eq.s32.totalorder %s26, 1
      %p128 = por %p126, %p127
      %p129 = scmp.ne.s32.totalorder %s120, %s121
      %p130 = scmp.eq.s32.totalorder %s26, 0
      %p131 = por %p129, %p130
      %p132 = scmp.ne.s32.totalorder %s120, %s121
      %p133 = scmp.eq.s32.totalorder %s27, 1
      %p134 = por %p132, %p133
      %p136 = scmp.ne.s32.totalorder %s121, %s135
      %p137 = scmp.eq.s32.totalorder %s27, 0
      %p138 = por %p136, %p137
      %s140 = sadd.s32 %s139, 1
      %p143 = scmp.eq.s32.totalorder %s21, 1
      %p144 = scmp.ne.s32.totalorder %s139, %s141
      %p145 = scmp.eq.s32.totalorder %s21, 0
      %p146 = por %p144, %p145
      %p147 = scmp.ne.s32.totalorder %s139, %s141
      %p148 = scmp.eq.s32.totalorder %s26, 1
      %p149 = por %p147, %p148
      %p150 = scmp.ne.s32.totalorder %s141, %s142
      %p151 = scmp.eq.s32.totalorder %s26, 0
      %p152 = por %p150, %p151
      %p153 = scmp.ne.s32.totalorder %s141, %s142
      %p154 = scmp.eq.s32.totalorder %s27, 1
      %p155 = por %p153, %p154
      %p157 = scmp.ne.s32.totalorder %s142, %s156
      %p158 = scmp.eq.s32.totalorder %s27, 0
      %p159 = por %p157, %p158
      %s161 = sadd.s32 %s160, 1
      %p164 = scmp.eq.s32.totalorder %s21, 1
      %p165 = scmp.ne.s32.totalorder %s160, %s162
      %p166 = scmp.eq.s32.totalorder %s21, 0
      %p167 = por %p165, %p166
      %p168 = scmp.ne.s32.totalorder %s160, %s162
      %p169 = scmp.eq.s32.totalorder %s26, 1
      %p170 = por %p168, %p169
      %p171 = scmp.ne.s32.totalorder %s162, %s163
      %p172 = scmp.eq.s32.totalorder %s26, 0
      %p173 = por %p171, %p172
      %p174 = scmp.ne.s32.totalorder %s162, %s163
      %p175 = scmp.eq.s32.totalorder %s27, 1
      %p176 = por %p174, %p175
      %p178 = scmp.ne.s32.totalorder %s163, %s177
      %p179 = scmp.eq.s32.totalorder %s27, 0
      %p180 = por %p178, %p179
      %s182 = sadd.s32 %s181, 1
      %p185 = scmp.eq.s32.totalorder %s21, 1
      %p186 = scmp.ne.s32.totalorder %s181, %s183
      %p187 = scmp.eq.s32.totalorder %s21, 0
      %p188 = por %p186, %p187
      %p189 = scmp.ne.s32.totalorder %s181, %s183
      %p190 = scmp.eq.s32.totalorder %s26, 1
      %p191 = por %p189, %p190
      %p192 = scmp.ne.s32.totalorder %s183, %s184
      %p193 = scmp.eq.s32.totalorder %s26, 0
      %p194 = por %p192, %p193
      %p195 = scmp.ne.s32.totalorder %s183, %s184
      %p196 = scmp.eq.s32.totalorder %s27, 1
      %p197 = por %p195, %p196
      %p199 = scmp.ne.s32.totalorder %s184, %s198
      %p200 = scmp.eq.s32.totalorder %s27, 0
      %p201 = por %p199, %p200
      %s203 = sadd.s32 %s202, 1
      %p206 = scmp.eq.s32.totalorder %s21, 1
      %p207 = scmp.ne.s32.totalorder %s202, %s204
      %p208 = scmp.eq.s32.totalorder %s21, 0
      %p209 = por %p207, %p208
      %p210 = scmp.ne.s32.totalorder %s202, %s204
      %p211 = scmp.eq.s32.totalorder %s26, 1
      %p212 = por %p210, %p211
      %p213 = scmp.ne.s32.totalorder %s204, %s205
      %p214 = scmp.eq.s32.totalorder %s26, 0
      %p215 = por %p213, %p214
      %p216 = scmp.ne.s32.totalorder %s204, %s205
      %p217 = scmp.eq.s32.totalorder %s27, 1
      %p218 = por %p216, %p217
      %p220 = scmp.ne.s32.totalorder %s205, %s219
      %p221 = scmp.eq.s32.totalorder %s27, 0
      %p222 = por %p220, %p221
      %s224 = sadd.s32 %s223, 1
      %p227 = scmp.eq.s32.totalorder %s21, 1
      %p228 = scmp.ne.s32.totalorder %s223, %s225
      %p229 = scmp.eq.s32.totalorder %s21, 0
      %p230 = por %p228, %p229
      %p231 = scmp.ne.s32.totalorder %s223, %s225
      %p232 = scmp.eq.s32.totalorder %s26, 1
      %p233 = por %p231, %p232
      %p234 = scmp.ne.s32.totalorder %s225, %s226
      %p235 = scmp.eq.s32.totalorder %s26, 0
      %p236 = por %p234, %p235
      %p237 = scmp.ne.s32.totalorder %s225, %s226
      %p238 = scmp.eq.s32.totalorder %s27, 1
      %p239 = por %p237, %p238
      %p241 = scmp.ne.s32.totalorder %s226, %s240
      %p242 = scmp.eq.s32.totalorder %s27, 0
      %p243 = por %p241, %p242
      %s244 = ssub.s32 %s21, %s28
      %p245 = scmp.eq.s32.totalorder %s244, 0
      %s247 = sadd.s32 %s246, 1
      %s248 = scalar_select %p245, %s246, %s247
      %p251 = pneg %p245
      %p252 = scmp.eq.s32.totalorder %s21, 1
      %p253 = por %p251, %p252
      %p254 = scmp.ne.s32.totalorder %s246, %s249
      %p255 = scmp.eq.s32.totalorder %s21, 0
      %p256 = por %p254, %p255
      %p257 = scmp.ne.s32.totalorder %s246, %s249
      %p258 = scmp.eq.s32.totalorder %s26, 1
      %p259 = por %p257, %p258
      %p260 = scmp.ne.s32.totalorder %s249, %s250
      %p261 = scmp.eq.s32.totalorder %s26, 0
      %p262 = por %p260, %p261
      %p263 = scmp.ne.s32.totalorder %s249, %s250
      %p264 = scmp.eq.s32.totalorder %s27, 1
      %p265 = por %p263, %p264
      %p267 = scmp.ne.s32.totalorder %s250, %s266
      %p268 = scmp.eq.s32.totalorder %s27, 0
      %p269 = por %p267, %p268
      %p270 = scmp.le.s32.totalorder 1, %s21
      %p271 = scmp.lt.s32.totalorder %s21, 3
      %p272 = pnand %p270, %p271
      %p273 = pneg %p272
      // Predicated region
      $region9: #{tpu_custom_call.1} parent=5 // pred_check
        _
      $region10: #{tpu_custom_call.1} parent=5 // pred_check_branch
        %275 = sbr.rel (%p272) target = $region12
      $region11: #{tpu_custom_call.1} parent=5 // pred_region
        %s276 = ssub.s32 %s21, 1
        // Predicated region
        $region13: #{tpu_custom_call.1} parent=11 // pred_check
          %p277 = pneg %p68
        $region14: #{tpu_custom_call.1} parent=11 // pred_check_branch
          %279 = sbr.rel (%p277) target = $region16
        $region15: #{tpu_custom_call.1} parent=11 // pred_region
          _
        $region16: #{tpu_custom_call.1} parent=11 // pred_fallthru
          _
        // Predicated region
        $region17: #{tpu_custom_call.1} parent=11 // pred_check
          %p280 = pneg %p89
        $region18: #{tpu_custom_call.1} parent=11 // pred_check_branch
          %282 = sbr.rel (%p280) target = $region20
        $region19: #{tpu_custom_call.1} parent=11 // pred_region
          _
        $region20: #{tpu_custom_call.1} parent=11 // pred_fallthru
          _
        // Predicated region
        $region21: #{tpu_custom_call.1} parent=11 // pred_check
          %p283 = pneg %p110
        $region22: #{tpu_custom_call.1} parent=11 // pred_check_branch
          %285 = sbr.rel (%p283) target = $region24
        $region23: #{tpu_custom_call.1} parent=11 // pred_region
          %287 = vsyncadd [#allocation3], 0
          %s289 = sshll.u32 %s3, 4
          %s290 = int_to_ptr.hbm [resolvable:$true] %s289
          %s291 = sshll.u32 [#allocation2], 4
          %s292 = int_to_ptr.vmem [resolvable:$true] %s291
          %294 = dma.hbm_to_vmem [thread:$0]  %s290, 64, %s292, [#allocation3]
        $region24: #{tpu_custom_call.1} parent=11 // pred_fallthru
          _
        // Predicated region
        $region25: #{tpu_custom_call.1} parent=11 // pred_check
          %p295 = pneg %p131
        $region26: #{tpu_custom_call.1} parent=11 // pred_check_branch
          %297 = sbr.rel (%p295) target = $region28
        $region27: #{tpu_custom_call.1} parent=11 // pred_region
          _
        $region28: #{tpu_custom_call.1} parent=11 // pred_fallthru
          _
        // Predicated region
        $region29: #{tpu_custom_call.1} parent=11 // pred_check
          %p298 = pneg %p152
        $region30: #{tpu_custom_call.1} parent=11 // pred_check_branch
          %300 = sbr.rel (%p298) target = $region32
        $region31: #{tpu_custom_call.1} parent=11 // pred_region
          _
        $region32: #{tpu_custom_call.1} parent=11 // pred_fallthru
          _
        // Predicated region
        $region33: #{tpu_custom_call.1} parent=11 // pred_check
          %p301 = pneg %p173
        $region34: #{tpu_custom_call.1} parent=11 // pred_check_branch
          %303 = sbr.rel (%p301) target = $region36
        $region35: #{tpu_custom_call.1} parent=11 // pred_region
          %305 = vsyncadd [#allocation6], 0
          %s306 = sshll.u32 %s6, 4
          %s307 = int_to_ptr.hbm [resolvable:$true] %s306
          %s308 = sshll.u32 [#allocation5], 4
          %s309 = int_to_ptr.vmem [resolvable:$true] %s308
          %314 = dma.hbm_to_vmem [thread:$0]  %s307, 256, %s309, [#allocation6], 64, 64, 4
        $region36: #{tpu_custom_call.1} parent=11 // pred_fallthru
          _
        // Predicated region
        $region37: #{tpu_custom_call.1} parent=11 // pred_check
          %p315 = pneg %p194
        $region38: #{tpu_custom_call.1} parent=11 // pred_check_branch
          %317 = sbr.rel (%p315) target = $region40
        $region39: #{tpu_custom_call.1} parent=11 // pred_region
          _
        $region40: #{tpu_custom_call.1} parent=11 // pred_fallthru
          _
        // Predicated region
        $region41: #{tpu_custom_call.1} parent=11 // pred_check
          %p318 = pneg %p215
        $region42: #{tpu_custom_call.1} parent=11 // pred_check_branch
          %320 = sbr.rel (%p318) target = $region44
        $region43: #{tpu_custom_call.1} parent=11 // pred_region
          _
        $region44: #{tpu_custom_call.1} parent=11 // pred_fallthru
          _
        // Predicated region
        $region45: #{tpu_custom_call.1} parent=11 // pred_check
          %p321 = pneg %p236
        $region46: #{tpu_custom_call.1} parent=11 // pred_check_branch
          %323 = sbr.rel (%p321) target = $region48
        $region47: #{tpu_custom_call.1} parent=11 // pred_region
          _
        $region48: #{tpu_custom_call.1} parent=11 // pred_fallthru
          _
      $region12: #{tpu_custom_call.1} parent=5 // pred_fallthru
        _
      %p324 = scmp.lt.s32.totalorder %s21, 2
      // Predicated region
      $region49: #{tpu_custom_call.1} parent=5 // pred_check
        %p325 = pneg %p324
      $region50: #{tpu_custom_call.1} parent=5 // pred_check_branch
        %327 = sbr.rel (%p325) target = $region52
      $region51: #{tpu_custom_call.1} parent=5 // pred_region
        // Predicated region
        $region53: #{tpu_custom_call.1} parent=51 // pred_check
          %p328 = pneg %p41
        $region54: #{tpu_custom_call.1} parent=51 // pred_check_branch
          %330 = sbr.rel (%p328) target = $region56
        $region55: #{tpu_custom_call.1} parent=51 // pred_region
          %p331 = scmp.lt.s32.totalorder %s21, 1
          %s332 = scalar_select %p331, %s21, 1
          %s333 = smul.addr %s332, 8
          %s334 = scalar_lea.vmem %s0, %s333
        $region56: #{tpu_custom_call.1} parent=51 // pred_fallthru
          _
      $region52: #{tpu_custom_call.1} parent=5 // pred_fallthru
        _
      %p335 = scmp.le.s32.totalorder 1, %s21
      %p336 = scmp.lt.s32.totalorder %s21, 3
      %p337 = pnand %p335, %p336
      %p338 = pneg %p337
      // Predicated region
      $region57: #{tpu_custom_call.1} parent=5 // pred_check
        _
      $region58: #{tpu_custom_call.1} parent=5 // pred_check_branch
        %340 = sbr.rel (%p337) target = $region60
      $region59: #{tpu_custom_call.1} parent=5 // pred_region
        %s341 = ssub.s32 %s21, 1
        // Predicated region
        $region61: #{tpu_custom_call.1} parent=59 // pred_check
          %p342 = pneg %p110
        $region62: #{tpu_custom_call.1} parent=59 // pred_check_branch
          %344 = sbr.rel (%p342) target = $region64
        $region63: #{tpu_custom_call.1} parent=59 // pred_region
          %346 = dma.done [#allocation3], 64
        $region64: #{tpu_custom_call.1} parent=59 // pred_fallthru
          _
        // Predicated region
        $region65: #{tpu_custom_call.1} parent=59 // pred_check
          %p347 = pneg %p173
        $region66: #{tpu_custom_call.1} parent=59 // pred_check_branch
          %349 = sbr.rel (%p347) target = $region68
        $region67: #{tpu_custom_call.1} parent=59 // pred_region
          %351 = dma.done [#allocation6], 256
        $region68: #{tpu_custom_call.1} parent=59 // pred_fallthru
          _
        %p352 = scmp.lt.s32.totalorder %s26, 1
        %s353 = scalar_select %p352, %s26, 1
        %s354 = smul.addr %s353, 8
        %s355 = scalar_lea.vmem %s0, %s354
        %p356 = pneg %p47
        %p357 = pneg %p44
        %p358 = pneg %p68
        %p359 = pneg %p65
        %p360 = pneg %p89
        %p361 = pneg %p86
        %p362 = pneg %p110
        %p363 = pneg %p107
        %p364 = pneg %p131
        %p365 = pneg %p128
        %p366 = pneg %p152
        %p367 = pneg %p149
        %p368 = pneg %p173
        %p369 = pneg %p170
        %p370 = pneg %p194
        %p371 = pneg %p191
        %p372 = pneg %p215
        %p373 = pneg %p212
        %p374 = pneg %p236
        %p375 = pneg %p233
        %p376 = pneg %p262
        %p377 = pneg %p259
        %s378 = sand.u32 %s249, 1
        %s379 = scalar_lea.sflag [#allocation4], %s378
        %s380 = sand.u32 %s249, 1
        %s381 = smul.addr %s380, 8
        %s382 = scalar_lea.vmem [#allocation7], %s381
        %p383 = scmp.lt.s32.totalorder %s26, 1
        %s384 = scalar_select %p383, %s26, 1
        %s385 = smul.addr %s384, 8
        %s386 = scalar_lea.vmem %s0, %s385
        %v388 = vld [vmem:[%s386] sm:$0xff]
        %v389 = vld [vmem:[#allocation2] sm:$0x1]
        %v390 = vld [vmem:[#allocation2 + $0x1] sm:$0x1]
        %v391 = vld [vmem:[#allocation2 + $0x2] sm:$0x1]
        %v392 = vld [vmem:[#allocation2 + $0x3] sm:$0x1]
        %vm393 = vcmask 261120
        %v394 = vsel %vm393, %v388, 0.0
        %395 = vadd.xlane.f32.xlu0 %v394
        %v396 = vpop.xlane.xlu0 %395
        %v397 = vrcp.pop 32.0
        %v398 = vmul.f32 32.0, %v397
        %v399 = vsub.f32 1.0, %v398
        %v400 = vmul.f32 %v397, %v399
        %v401 = vadd.f32 %v397, %v400
        %vm402 = vweird.f32 %v397
        %v403 = vsel %vm402, %v397, %v401
        %v404 = vmul.f32 %v396, %v403
        %v405 = vsub.f32 %v388, %v404
        %v406 = vmul.f32 %v405, %v405
        %v407 = vsel %vm393, %v406, 0.0
        %408 = vadd.xlane.f32.xlu0 %v407
        %v409 = vpop.xlane.xlu0 %408
        %v410 = vmul.f32 %v409, %v403
        %v411 = vadd.f32 %v410, 1e-05
        %v412 = vrsqrt.pop %v411
        %v413 = vmul.f32 %v412, %v411
        %v414 = vmul.f32 %v413, %v412
        %v415 = vmul.f32 0.5, %v414
        %v416 = vsub.f32 1.5, %v415
        %v417 = vmul.f32 %v412, %v416
        %vm418 = vweird.f32 %v411
        %vm419 = vweird.f32 %v412
        %vm420 = vmor %vm418, %vm419
        %v421 = vsel %vm420, %v412, %v417
        %v422 = vmul.f32 %v405, %v421
        %v423 = vperm.slane %v389, 0
        %v424 = vmul.f32 %v422, %v423
        %v425 = vperm.slane %v390, 0
        %v426 = vadd.f32 %v424, %v425
        %v427 = vpack.c.bf16 %v426, %v426
        %v428 = vld [vmem:[%s1] sm:$0xf]
        %v429 = vld [vmem:[%s1 + $0x4] sm:$0xf]
        %v430 = vld [vmem:[%s1 + $0x8] sm:$0xf]
        %v431 = vld [vmem:[%s1 + $0xc] sm:$0xf]
        %v432 = vld [vmem:[%s2] sm:$0x1]
        %v434 = vperm.slane %v432, 0
        %v440 = vunpack.c.l.b16 %v428
        %v441 = vunpack.c.l.b16 %v429
        %v442 = vunpack.c.l.b16 %v430
        %v443 = vunpack.c.l.b16 %v431
        %v444 = vpack.c.b16 %v441, %v440
        %v445 = vpack.c.b16 %v443, %v442
        %v449 = vsel %vm393, %v427, 0
        %451 = vmatpush.bf16.msra.mxu0 0
        %452 = vmatpush.bf16.msra.mxu0 0
        %453 = vmatpush.bf16.msra.mxu0 0
        %454 = vmatpush.bf16.msra.mxu0 0
        %455 = vmatpush.bf16.msra.mxu0 0
        %456 = vmatpush.bf16.msra.mxu0 0
        %457 = vmatpush.bf16.msra.mxu0 %v445
        %458 = vmatpush.bf16.msra.mxu0 %v444
        %459 = vmatmul.bf16.gmra.mxu0 %v449
        %v460 = vpop.f32.mrf.mxu0
        %v461 = vadd.f32 %v434, %v460
        %v462 = vpop.f32.mrf.mxu0
        %463 = vdwg.mxu0
        %v464 = vpack.c.bf16 %v461, %v461
        %v465 = vlaneseq
        %v466 = vshrl.u32 %v465, 7
        %v467 = vlaneseq
        %v468 = vand.u32 %v467, 127
        %vm469 = vcmp.ge.s32.totalorder %v466, %v468
        %v471 = vunpack.c.l.b16 %v464
        %v472 = vpack.c.b16 %v471, %v471
        %473 = vrot.lane.b32.xlu0 %v472, 96
        %v474 = vpop.permute.xlu0 %473
        %vm475 = vcmask 64512
        %v477 = vsel %vm475, %v464, 0
        %v480 = vsel %vm475, %v474, 0
        %482 = vmatpush.bf16.xpose.msra.mxu0 0
        %483 = vmatpush.bf16.xpose.msra.mxu0 0
        %484 = vmatpush.bf16.xpose.msra.mxu0 0
        %485 = vmatpush.bf16.xpose.msra.mxu0 0
        %486 = vmatpush.bf16.xpose.msra.mxu0 0
        %487 = vmatpush.bf16.xpose.msra.mxu0 0
        %488 = vmatpush.bf16.xpose.msra.mxu0 0
        %489 = vmatpush.bf16.xpose.msra.mxu0 %v480
        %490 = vmatmul.bf16.gmra.mxu0 %v477
        %v491 = vpop.f32.mrf.mxu0
        %v492 = vadd.f32 0.0, %v491
        %v493 = vpop.f32.mrf.mxu0
        %494 = vdwg.mxu0
        %v495 = vsel %vm469, %v492, -1e+30
        %v496 = vsel %vm475, %v495, -inf
        %497 = vmax.xlane.f32.xlu0 %v496
        %v498 = vpop.xlane.xlu0 %497
        %v499 = vsub.f32 %v495, %v498
        %v500 = vmul.f32 %v499, 1.442695
        %v501 = vpow.pop %v500
        %v502 = vsel %vm475, %v501, 0.0
        %503 = vadd.xlane.f32.xlu0 %v502
        %v504 = vpop.xlane.xlu0 %503
        %v505 = vrcp.pop %v504
        %v506 = vpack.c.bf16 %v501, %v501
        %507 = vrot.lane.b32.xlu0 %v472, 64
        %v508 = vpop.permute.xlu0 %507
        %v510 = vsel %vm475, %v506, 0
        %vm512 = vcmask 1043456
        %v514 = vsel %vm512, %v508, 0
        %516 = vmatpush.bf16.msra.mxu0 0
        %517 = vmatpush.bf16.msra.mxu0 0
        %518 = vmatpush.bf16.msra.mxu0 0
        %519 = vmatpush.bf16.msra.mxu0 0
        %520 = vmatpush.bf16.msra.mxu0 0
        %521 = vmatpush.bf16.msra.mxu0 0
        %522 = vmatpush.bf16.msra.mxu0 0
        %523 = vmatpush.bf16.msra.mxu0 %v514
        %524 = vmatmul.bf16.gmra.mxu0 %v510
        %v525 = vpop.f32.mrf.mxu0
        %v526 = vadd.f32 0.0, %v525
        %v527 = vpop.f32.mrf.mxu0
        %528 = vdwg.mxu0
        %v529 = vmul.f32 %v526, %v505
        %v530 = vpack.c.bf16 %v529, %v529
        %531 = vrot.lane.b32.xlu0 %v472, 120
        %v532 = vpop.permute.xlu0 %531
        %533 = vrot.lane.b32.xlu0 %v472, 88
        %v534 = vpop.permute.xlu0 %533
        %v536 = vsel %vm475, %v532, 0
        %v539 = vsel %vm475, %v534, 0
        %541 = vmatpush.bf16.xpose.msra.mxu0 0
        %542 = vmatpush.bf16.xpose.msra.mxu0 0
        %543 = vmatpush.bf16.xpose.msra.mxu0 0
        %544 = vmatpush.bf16.xpose.msra.mxu0 0
        %545 = vmatpush.bf16.xpose.msra.mxu0 0
        %546 = vmatpush.bf16.xpose.msra.mxu0 0
        %547 = vmatpush.bf16.xpose.msra.mxu0 0
        %548 = vmatpush.bf16.xpose.msra.mxu0 %v539
        %549 = vmatmul.bf16.gmra.mxu0 %v536
        %v550 = vpop.f32.mrf.mxu0
        %v551 = vadd.f32 0.0, %v550
        %v552 = vpop.f32.mrf.mxu0
        %553 = vdwg.mxu0
        %v554 = vsel %vm469, %v551, -1e+30
        %v555 = vsel %vm475, %v554, -inf
        %556 = vmax.xlane.f32.xlu0 %v555
        %v557 = vpop.xlane.xlu0 %556
        %v558 = vsub.f32 %v554, %v557
        %v559 = vmul.f32 %v558, 1.442695
        %v560 = vpow.pop %v559
        %v561 = vsel %vm475, %v560, 0.0
        %562 = vadd.xlane.f32.xlu0 %v561
        %v563 = vpop.xlane.xlu0 %562
        %v564 = vrcp.pop %v563
        %v565 = vpack.c.bf16 %v560, %v560
        %566 = vrot.lane.b32.xlu0 %v472, 56
        %v567 = vpop.permute.xlu0 %566
        %v569 = vsel %vm475, %v565, 0
        %v572 = vsel %vm512, %v567, 0
        %574 = vmatpush.bf16.msra.mxu0 0
        %575 = vmatpush.bf16.msra.mxu0 0
        %576 = vmatpush.bf16.msra.mxu0 0
        %577 = vmatpush.bf16.msra.mxu0 0
        %578 = vmatpush.bf16.msra.mxu0 0
        %579 = vmatpush.bf16.msra.mxu0 0
        %580 = vmatpush.bf16.msra.mxu0 0
        %581 = vmatpush.bf16.msra.mxu0 %v572
        %582 = vmatmul.bf16.gmra.mxu0 %v569
        %v583 = vpop.f32.mrf.mxu0
        %v584 = vadd.f32 0.0, %v583
        %v585 = vpop.f32.mrf.mxu0
        %586 = vdwg.mxu0
        %v587 = vmul.f32 %v584, %v564
        %v588 = vpack.c.bf16 %v587, %v587
        %589 = vrot.lane.b32.xlu0 %v472, 112
        %v590 = vpop.permute.xlu0 %589
        %591 = vrot.lane.b32.xlu0 %v472, 80
        %v592 = vpop.permute.xlu0 %591
        %v594 = vsel %vm475, %v590, 0
        %v597 = vsel %vm475, %v592, 0
        %599 = vmatpush.bf16.xpose.msra.mxu0 0
        %600 = vmatpush.bf16.xpose.msra.mxu0 0
        %601 = vmatpush.bf16.xpose.msra.mxu0 0
        %602 = vmatpush.bf16.xpose.msra.mxu0 0
        %603 = vmatpush.bf16.xpose.msra.mxu0 0
        %604 = vmatpush.bf16.xpose.msra.mxu0 0
        %605 = vmatpush.bf16.xpose.msra.mxu0 0
        %606 = vmatpush.bf16.xpose.msra.mxu0 %v597
        %607 = vmatmul.bf16.gmra.mxu0 %v594
        %v608 = vpop.f32.mrf.mxu0
        %v609 = vadd.f32 0.0, %v608
        %v610 = vpop.f32.mrf.mxu0
        %611 = vdwg.mxu0
        %v612 = vsel %vm469, %v609, -1e+30
        %v613 = vsel %vm475, %v612, -inf
        %614 = vmax.xlane.f32.xlu0 %v613
        %v615 = vpop.xlane.xlu0 %614
        %v616 = vsub.f32 %v612, %v615
        %v617 = vmul.f32 %v616, 1.442695
        %v618 = vpow.pop %v617
        %v619 = vsel %vm475, %v618, 0.0
        %620 = vadd.xlane.f32.xlu0 %v619
        %v621 = vpop.xlane.xlu0 %620
        %v622 = vrcp.pop %v621
        %v623 = vpack.c.bf16 %v618, %v618
        %624 = vrot.lane.b32.xlu0 %v472, 48
        %v625 = vpop.permute.xlu0 %624
        %v627 = vsel %vm475, %v623, 0
        %v630 = vsel %vm512, %v625, 0
        %632 = vmatpush.bf16.msra.mxu0 0
        %633 = vmatpush.bf16.msra.mxu0 0
        %634 = vmatpush.bf16.msra.mxu0 0
        %635 = vmatpush.bf16.msra.mxu0 0
        %636 = vmatpush.bf16.msra.mxu0 0
        %637 = vmatpush.bf16.msra.mxu0 0
        %638 = vmatpush.bf16.msra.mxu0 0
        %639 = vmatpush.bf16.msra.mxu0 %v630
        %640 = vmatmul.bf16.gmra.mxu0 %v627
        %v641 = vpop.f32.mrf.mxu0
        %v642 = vadd.f32 0.0, %v641
        %v643 = vpop.f32.mrf.mxu0
        %644 = vdwg.mxu0
        %v645 = vmul.f32 %v642, %v622
        %v646 = vpack.c.bf16 %v645, %v645
        %647 = vrot.lane.b32.xlu0 %v472, 104
        %v648 = vpop.permute.xlu0 %647
        %649 = vrot.lane.b32.xlu0 %v472, 72
        %v650 = vpop.permute.xlu0 %649
        %v652 = vsel %vm475, %v648, 0
        %v655 = vsel %vm475, %v650, 0
        %657 = vmatpush.bf16.xpose.msra.mxu0 0
        %658 = vmatpush.bf16.xpose.msra.mxu0 0
        %659 = vmatpush.bf16.xpose.msra.mxu0 0
        %660 = vmatpush.bf16.xpose.msra.mxu0 0
        %661 = vmatpush.bf16.xpose.msra.mxu0 0
        %662 = vmatpush.bf16.xpose.msra.mxu0 0
        %663 = vmatpush.bf16.xpose.msra.mxu0 0
        %664 = vmatpush.bf16.xpose.msra.mxu0 %v655
        %665 = vmatmul.bf16.gmra.mxu0 %v652
        %v666 = vpop.f32.mrf.mxu0
        %v667 = vadd.f32 0.0, %v666
        %v668 = vpop.f32.mrf.mxu0
        %669 = vdwg.mxu0
        %v670 = vsel %vm469, %v667, -1e+30
        %v671 = vsel %vm475, %v670, -inf
        %672 = vmax.xlane.f32.xlu0 %v671
        %v673 = vpop.xlane.xlu0 %672
        %v674 = vsub.f32 %v670, %v673
        %v675 = vmul.f32 %v674, 1.442695
        %v676 = vpow.pop %v675
        %v677 = vsel %vm475, %v676, 0.0
        %678 = vadd.xlane.f32.xlu0 %v677
        %v679 = vpop.xlane.xlu0 %678
        %v680 = vrcp.pop %v679
        %v681 = vpack.c.bf16 %v676, %v676
        %682 = vrot.lane.b32.xlu0 %v472, 40
        %v683 = vpop.permute.xlu0 %682
        %v685 = vsel %vm475, %v681, 0
        %v688 = vsel %vm512, %v683, 0
        %690 = vmatpush.bf16.msra.mxu0 0
        %691 = vmatpush.bf16.msra.mxu0 0
        %692 = vmatpush.bf16.msra.mxu0 0
        %693 = vmatpush.bf16.msra.mxu0 0
        %694 = vmatpush.bf16.msra.mxu0 0
        %695 = vmatpush.bf16.msra.mxu0 0
        %696 = vmatpush.bf16.msra.mxu0 0
        %697 = vmatpush.bf16.msra.mxu0 %v688
        %698 = vmatmul.bf16.gmra.mxu0 %v685
        %v699 = vpop.f32.mrf.mxu0
        %v700 = vadd.f32 0.0, %v699
        %v701 = vpop.f32.mrf.mxu0
        %702 = vdwg.mxu0
        %v703 = vmul.f32 %v700, %v680
        %v704 = vpack.c.bf16 %v703, %v703
        %v706 = vunpack.c.l.b16 %v588
        %v707 = vpack.c.b16 %v706, %v706
        %708 = vrot.lane.b32.xlu0 %v707, 8
        %v709 = vpop.permute.xlu0 %708
        %v711 = vunpack.c.l.b16 %v646
        %v712 = vpack.c.b16 %v711, %v711
        %713 = vrot.lane.b32.xlu0 %v712, 16
        %v714 = vpop.permute.xlu0 %713
        %v716 = vunpack.c.l.b16 %v704
        %v717 = vpack.c.b16 %v716, %v716
        %718 = vrot.lane.b32.xlu0 %v717, 24
        %v719 = vpop.permute.xlu0 %718
        %v722 = vsel %vm475, %v530, %v709
        %vm723 = vcmask 130048
        %v725 = vsel %vm723, %v722, %v714
        %vm726 = vcmask 195584
        %v728 = vsel %vm726, %v725, %v719
        %v729 = vld [vmem:[%s4] sm:$0xf]
        %v730 = vld [vmem:[%s4 + $0x4] sm:$0xf]
        %v731 = vld [vmem:[%s4 + $0x8] sm:$0xf]
        %v732 = vld [vmem:[%s4 + $0xc] sm:$0xf]
        %v733 = vld [vmem:[%s5] sm:$0x1]
        %v735 = vperm.slane %v733, 0
        %v741 = vunpack.c.l.b16 %v729
        %v742 = vunpack.c.l.b16 %v730
        %v743 = vunpack.c.l.b16 %v731
        %v744 = vunpack.c.l.b16 %v732
        %v745 = vpack.c.b16 %v742, %v741
        %v746 = vpack.c.b16 %v744, %v743
        %v749 = vsel %vm393, %v728, 0
        %751 = vmatpush.bf16.msra.mxu0 0
        %752 = vmatpush.bf16.msra.mxu0 0
        %753 = vmatpush.bf16.msra.mxu0 0
        %754 = vmatpush.bf16.msra.mxu0 0
        %755 = vmatpush.bf16.msra.mxu0 0
        %756 = vmatpush.bf16.msra.mxu0 0
        %757 = vmatpush.bf16.msra.mxu0 %v746
        %758 = vmatpush.bf16.msra.mxu0 %v745
        %759 = vmatmul.bf16.gmra.mxu0 %v749
        %v760 = vpop.f32.mrf.mxu0
        %v761 = vadd.f32 %v735, %v760
        %v762 = vpop.f32.mrf.mxu0
        %763 = vdwg.mxu0
        %v764 = vsel %vm393, %v761, 0.0
        %765 = vadd.xlane.f32.xlu0 %v764
        %v766 = vpop.xlane.xlu0 %765
        %v767 = vmul.f32 %v766, %v403
        %v768 = vsub.f32 %v761, %v767
        %v769 = vmul.f32 %v768, %v768
        %v770 = vsel %vm393, %v769, 0.0
        %771 = vadd.xlane.f32.xlu0 %v770
        %v772 = vpop.xlane.xlu0 %771
        %v773 = vmul.f32 %v772, %v403
        %v774 = vadd.f32 %v773, 1e-05
        %v775 = vrsqrt.pop %v774
        %v776 = vmul.f32 %v775, %v774
        %v777 = vmul.f32 %v776, %v775
        %v778 = vmul.f32 0.5, %v777
        %v779 = vsub.f32 1.5, %v778
        %v780 = vmul.f32 %v775, %v779
        %vm781 = vweird.f32 %v774
        %vm782 = vweird.f32 %v775
        %vm783 = vmor %vm781, %vm782
        %v784 = vsel %vm783, %v775, %v780
        %v785 = vmul.f32 %v768, %v784
        %v786 = vperm.slane %v391, 0
        %v787 = vmul.f32 %v785, %v786
        %v788 = vperm.slane %v392, 0
        %v789 = vadd.f32 %v787, %v788
        %v790 = vpack.c.bf16 %v789, %v789
        %v791 = vld [vmem:[#allocation5] sm:$0xf]
        %v792 = vld [vmem:[#allocation5 + $0x4] sm:$0xf]
        %v793 = vld [vmem:[#allocation5 + $0x8] sm:$0xf]
        %v794 = vld [vmem:[#allocation5 + $0xc] sm:$0xf]
        %v795 = vld [vmem:[%s7] sm:$0x1]
        %v797 = vperm.slane %v795, 0
        %v803 = vunpack.c.l.b16 %v791
        %v804 = vunpack.c.l.b16 %v792
        %v805 = vunpack.c.l.b16 %v793
        %v806 = vunpack.c.l.b16 %v794
        %v807 = vpack.c.b16 %v804, %v803
        %v808 = vpack.c.b16 %v806, %v805
        %v812 = vsel %vm393, %v790, 0
        %814 = vmatpush.bf16.msra.mxu0 0
        %815 = vmatpush.bf16.msra.mxu0 0
        %816 = vmatpush.bf16.msra.mxu0 0
        %817 = vmatpush.bf16.msra.mxu0 0
        %818 = vmatpush.bf16.msra.mxu0 0
        %819 = vmatpush.bf16.msra.mxu0 0
        %820 = vmatpush.bf16.msra.mxu0 %v808
        %821 = vmatpush.bf16.msra.mxu0 %v807
        %822 = vmatmul.bf16.gmra.mxu0 %v812
        %v823 = vpop.f32.mrf.mxu0
        %v824 = vadd.f32 %v797, %v823
        %v825 = vpop.f32.mrf.mxu0
        %826 = vdwg.mxu0
        %v827 = vmul.f32 %v824, %v824
        %v828 = vmul.f32 %v824, %v827
        %v829 = vmul.f32 %v828, 0.044715
        %v830 = vadd.f32 %v824, %v829
        %v831 = vmul.f32 %v830, 0.7978846
        %v832 = vtanh.pop %v831
        %v833 = vadd.f32 %v832, 1.0
        %v834 = vmul.f32 %v833, 0.5
        %v835 = vmul.f32 %v824, %v834
        %v836 = vpack.c.bf16 %v835, %v835
        %v837 = vld [vmem:[%s8] sm:$0xf]
        %v838 = vld [vmem:[%s8 + $0x4] sm:$0xf]
        %v839 = vld [vmem:[%s8 + $0x8] sm:$0xf]
        %v840 = vld [vmem:[%s8 + $0xc] sm:$0xf]
        %v841 = vld [vmem:[%s8 + $0x10] sm:$0xf]
        %v842 = vld [vmem:[%s8 + $0x14] sm:$0xf]
        %v843 = vld [vmem:[%s8 + $0x18] sm:$0xf]
        %v844 = vld [vmem:[%s8 + $0x1c] sm:$0xf]
        %v845 = vld [vmem:[%s9] sm:$0x1]
        %v847 = vperm.slane %v845, 0
        %v857 = vunpack.c.l.b16 %v837
        %v858 = vunpack.c.l.b16 %v838
        %v859 = vunpack.c.l.b16 %v839
        %v860 = vunpack.c.l.b16 %v840
        %v861 = vunpack.c.l.b16 %v841
        %v862 = vunpack.c.l.b16 %v842
        %v863 = vunpack.c.l.b16 %v843
        %v864 = vunpack.c.l.b16 %v844
        %v865 = vpack.c.b16 %v858, %v857
        %v866 = vpack.c.b16 %v860, %v859
        %v867 = vpack.c.b16 %v862, %v861
        %v868 = vpack.c.b16 %v864, %v863
        %vm873 = vcmask 523264
        %v875 = vsel %vm873, %v836, 0
        %877 = vmatpush.bf16.msra.mxu0 0
        %878 = vmatpush.bf16.msra.mxu0 0
        %879 = vmatpush.bf16.msra.mxu0 0
        %880 = vmatpush.bf16.msra.mxu0 0
        %881 = vmatpush.bf16.msra.mxu0 %v868
        %882 = vmatpush.bf16.msra.mxu0 %v867
        %883 = vmatpush.bf16.msra.mxu0 %v866
        %884 = vmatpush.bf16.msra.mxu0 %v865
        %885 = vmatmul.bf16.gmra.mxu0 %v875
        %v886 = vpop.f32.mrf.mxu0
        %v887 = vadd.f32 %v847, %v886
        %v888 = vpop.f32.mrf.mxu0
        %889 = vdwg.mxu0
        %890 = vst.msk [vmem:[%s382] sm:$0xff] %vm393, %v887
        %s891 = sand.u32 %s249, 1
        %s892 = scalar_lea.sflag [#allocation4], %s891
        %s893 = sand.u32 %s249, 1
        %s894 = smul.addr %s893, 8
        %s895 = scalar_lea.vmem [#allocation7], %s894
        // Predicated region
        $region69: #{tpu_custom_call.1} parent=59 // pred_check
          %p896 = pneg %p259
        $region70: #{tpu_custom_call.1} parent=59 // pred_check_branch
          %898 = sbr.rel (%p896) target = $region72
        $region71: #{tpu_custom_call.1} parent=59 // pred_region
          %900 = vsyncadd %s892, 0
          %s901 = smul.addr %s26, 8
          %s902 = scalar_lea.hbm %s10, %s901
          %s904 = sshll.u32 %s895, 4
          %s905 = int_to_ptr.vmem [resolvable:$true] %s904
          %s906 = sshll.u32 %s902, 4
          %s907 = int_to_ptr.hbm [resolvable:$true] %s906
          %909 = dma.vmem_to_hbm [thread:$0]  %s905, 128, %s907, %s892
        $region72: #{tpu_custom_call.1} parent=59 // pred_fallthru
          _
      $region60: #{tpu_custom_call.1} parent=5 // pred_fallthru
        _
      %p910 = scmp.le.s32.totalorder 2, %s21
      // Predicated region
      $region73: #{tpu_custom_call.1} parent=5 // pred_check
        %p911 = pneg %p910
      $region74: #{tpu_custom_call.1} parent=5 // pred_check_branch
        %913 = sbr.rel (%p911) target = $region76
      $region75: #{tpu_custom_call.1} parent=5 // pred_region
        %s914 = ssub.s32 %s21, 2
        // Predicated region
        $region77: #{tpu_custom_call.1} parent=75 // pred_check
          %p915 = pneg %p265
        $region78: #{tpu_custom_call.1} parent=75 // pred_check_branch
          %917 = sbr.rel (%p915) target = $region80
        $region79: #{tpu_custom_call.1} parent=75 // pred_region
          %s918 = sand.u32 %s250, 1
          %s919 = scalar_lea.sflag [#allocation4], %s918
          %s920 = sand.u32 %s250, 1
          %s921 = smul.addr %s920, 8
          %s922 = scalar_lea.vmem [#allocation7], %s921
          %924 = dma.done %s919, 128
        $region80: #{tpu_custom_call.1} parent=75 // pred_fallthru
          _
      $region76: #{tpu_custom_call.1} parent=5 // pred_fallthru
        _
    $region6: #{tpu_custom_call.1} parent=1 // loop_footer
      %s25 = sadd.s32 1, %s21
    $region7: #{tpu_custom_call.1} parent=1 // loop_footer_branch
      %20 = sbr.rel target = $region3
    $region8: #{tpu_custom_call.1} parent=1 // loop_exit
      _
    %925 = vsyncpa [#allocation3], 1
    %s926 = scalar_lea.sflag [#allocation3], 1
    %927 = vsyncpa %s926, 1
    %928 = vsyncpa [#allocation6], 1
    %929 = vsyncpa [#allocation4], 1
    %s930 = scalar_lea.sflag [#allocation4], 1
    %931 = vsyncpa %s930, 1

</llo_original>
